<compile_context>
chip_gen: v6e
topology: v6e:2x2x1
jax: 0.10.0
libtpu: 0.0.40
codegen_flags: <defaults>
</compile_context>

<pallas_src>
import math

import jax
import jax.numpy as jnp
from jax.experimental import pallas as pl
from jax.experimental.pallas import tpu as pltpu

_LANE = 128        # f32 vreg lane width
_SUBLANE = 8       # f32 vreg sublane count
_MAX_TB = 256      # batch tile: fills the 256-wide MXU M dim on v6e/v7x
_NEG_SLOPE = 0.01  # PyTorch F.leaky_relu default


def _round_up(x, m):
    return (x + m - 1) // m * m


def _usable_vmem_bytes():
    """Per-generation VMEM cap: physical capacity minus headroom for compiler scratch."""
    try:
        cap = int(pltpu.get_tpu_info().vmem_capacity_bytes)
    except Exception:
        cap = 128 << 20                      # v5e/v6e default; v7x reports 64 MiB
    return max(cap - (12 << 20), 32 << 20)


# ----------------------------------------------------------------------------
# Kernels
# ----------------------------------------------------------------------------
def _make_fused_encoder_kernel(n_hidden_layers):
    """Whole-weight path: every layer's weight stays VMEM resident across grid steps."""

    def kernel(*refs):
        # refs = (x, w0, b0, w1, b1, ..., w_head, b_head, out)
        x_ref = refs[0]
        o_ref = refs[-1]
        wb = refs[1:-1]

        h = x_ref[...].astype(jnp.bfloat16)            # in-kernel cast (free under MXU)
        for l in range(n_hidden_layers):               # unrolled: static layer count
            w = wb[2 * l][...]                         # bf16 [fan_in(_pad), fan_out_pad]
            b = wb[2 * l + 1][...]                     # f32  [1, fan_out_pad]
            y = jnp.dot(h, w, preferred_element_type=jnp.float32) + b
            y = jnp.where(y > 0, y, _NEG_SLOPE * y)    # leaky_relu in f32
            h = y.astype(jnp.bfloat16)

        w_head = wb[2 * n_hidden_layers][...]          # fused mu||logvar head
        b_head = wb[2 * n_hidden_layers + 1][...]
        y = jnp.dot(h, w_head, preferred_element_type=jnp.float32) + b_head
        o_ref[...] = y.astype(o_ref.dtype)             # single lane-dense store

    return kernel


def _make_ktiled_encoder_kernel(n_hidden_layers):
    """K-tiled first layer (huge n_inputs / v7x 64 MiB VMEM).

    grid = (batch tiles ["parallel"], K tiles of layer 0 ["arbitrary"]).
    Layer-0 partial products accumulate into an f32 VMEM scratch; on the last K step
    bias + LeakyReLU and all remaining (small, resident) layers run, then the output
    tile is stored.
    """

    def kernel(*refs):
        # refs = (x, w0, b0, w1, b1, ..., w_head, b_head, out, acc)
        x_ref = refs[0]
        o_ref = refs[-2]
        acc_ref = refs[-1]
        wb = refs[1:-2]

        k = pl.program_id(1)

        @pl.when(k == 0)
        def _():
            acc_ref[...] = jnp.zeros_like(acc_ref)

        xb = x_ref[...].astype(jnp.bfloat16)
        acc_ref[...] += jnp.dot(xb, wb[0][...], preferred_element_type=jnp.float32)

        @pl.when(k == pl.num_programs(1) - 1)
        def _():
            y = acc_ref[...] + wb[1][...]
            y = jnp.where(y > 0, y, _NEG_SLOPE * y)
            h = y.astype(jnp.bfloat16)
            for l in range(1, n_hidden_layers):
                w = wb[2 * l][...]
                b = wb[2 * l + 1][...]
                y = jnp.dot(h, w, preferred_element_type=jnp.float32) + b
                y = jnp.where(y > 0, y, _NEG_SLOPE * y)
                h = y.astype(jnp.bfloat16)
            w_head = wb[2 * n_hidden_layers][...]
            b_head = wb[2 * n_hidden_layers + 1][...]
            y = jnp.dot(h, w_head, preferred_element_type=jnp.float32) + b_head
            o_ref[...] = y.astype(o_ref.dtype)

    return kernel


# ----------------------------------------------------------------------------
# One-time parameter preparation (pad + cast ONCE, not per forward call)
# ----------------------------------------------------------------------------
def prepare_encoder_params(params, *, force_k_tiling=False, k_tile=512):
    """Pad/cast parameters once: bf16 weights, f32 biases, fused mu||logvar head."""
    layers = list(params["layers"])
    n_layers = len(layers)
    w_mu, b_mu = params["fc_mu"]
    w_var, b_var = params["fc_var"]
    latent = w_mu.shape[1]
    n_inputs = layers[0][0].shape[0] if n_layers else w_mu.shape[0]

    # Decide whether the first (largest) layer weight must be K-tiled: on v7x's 64 MiB
    # a whole-weight-resident first layer stops fitting at ~half the n_inputs of v6e.
    budget = _usable_vmem_bytes()
    k_tiled, tk, k_pad = False, None, n_inputs
    if n_layers:
        h0_pad = _round_up(layers[0][0].shape[1], _LANE)
        w0_resident_bytes = _round_up(n_inputs, _LANE) * h0_pad * 2  # bf16
        if force_k_tiling or w0_resident_bytes > budget // 3:
            k_tiled = True
            tk = max(_LANE, _round_up(min(k_tile, n_inputs), _LANE))
            k_pad = _round_up(n_inputs, tk)

    weights, widths = [], []
    fan_in_pad = k_pad if k_tiled else n_inputs
    for (w, b) in layers:
        fi, fo = w.shape
        fo_pad = _round_up(fo, _LANE)
        w_p = jnp.zeros((fan_in_pad, fo_pad), jnp.bfloat16)
        w_p = w_p.at[:fi, :fo].set(w.astype(jnp.bfloat16))
        b_p = jnp.zeros((1, fo_pad), jnp.float32)
        b_p = b_p.at[:, :fo].set(jnp.asarray(b, jnp.float32).reshape(1, -1))
        weights += [w_p, b_p]
        widths.append(fo_pad)
        fan_in_pad = fo_pad

    # fused mu||logvar head -> one wide MXU pass + a single lane-dense store
    fi = w_mu.shape[0]
    head_pad = _round_up(2 * latent, _LANE)
    w_head = jnp.zeros((fan_in_pad, head_pad), jnp.bfloat16)
    w_head = w_head.at[:fi, :latent].set(w_mu.astype(jnp.bfloat16))
    w_head = w_head.at[:fi, latent:2 * latent].set(w_var.astype(jnp.bfloat16))
    b_head = jnp.zeros((1, head_pad), jnp.float32)
    b_head = b_head.at[:, :latent].set(jnp.asarray(b_mu, jnp.float32).reshape(1, -1))
    b_head = b_head.at[:, latent:2 * latent].set(
        jnp.asarray(b_var, jnp.float32).reshape(1, -1))
    weights += [w_head, b_head]
    widths.append(head_pad)

    return {
        "weights": weights,       # already padded + cast, device-resident
        "widths": widths,         # padded fan_out per stage (incl. head)
        "n_hidden_layers": n_layers,
        "n_inputs": n_inputs,
        "latent": latent,
        "head_pad": head_pad,
        "k_tiled": k_tiled,
        "tk": tk,
        "k_pad": k_pad,
    }


# ----------------------------------------------------------------------------
# Forward pass
# ----------------------------------------------------------------------------
def _choose_batch_tile(batch, n_inputs, x_itemsize, k_tiled, budget):
    b_al = _round_up(max(batch, 1), _SUBLANE)
    tb = min(_MAX_TB, b_al)
    # keep >= 2 batch tiles when the batch allows it so both v7x TensorCores get work
    if b_al // tb < 2 and b_al > _SUBLANE:
        tb = _round_up(-(-b_al // 2), _SUBLANE)
    if not k_tiled:
        # shrink tb if the double-buffered streamed input tile would hog VMEM
        while tb > _SUBLANE and 2 * tb * n_inputs * x_itemsize > budget // 3:
            tb = _round_up(tb // 2, _SUBLANE)
    return tb


def linear_encoder_forward(prepared, spikes, *, single_buffer_weights=True):
    """spikes: [batch, n_neurons, n_timesteps] -> (mu, logvar): [batch, latent]."""
    batch = spikes.shape[0]
    x = spikes.reshape(batch, -1)                      # flatten(1); stays f32 in HBM
    if x.dtype not in (jnp.float32, jnp.bfloat16):
        x = x.astype(jnp.float32)

    n_inputs = prepared["n_inputs"]
    assert x.shape[1] == n_inputs, "spikes do not match the encoder's n_inputs"
    latent = prepared["latent"]
    head_pad = prepared["head_pad"]
    n_hidden = prepared["n_hidden_layers"]
    weights = prepared["weights"]
    widths = prepared["widths"]
    k_tiled = prepared["k_tiled"]

    budget = _usable_vmem_bytes()
    x_itemsize = x.dtype.itemsize
    tb = _choose_batch_tile(batch, n_inputs, x_itemsize, k_tiled, budget)
    b_pad = _round_up(batch, tb)

    # pad only what is strictly needed: batch rows, plus the feature tail when K-tiling
    pad_cols = (prepared["k_pad"] - n_inputs) if k_tiled else 0
    if b_pad != batch or pad_cols:
        x = jnp.pad(x, ((0, b_pad - batch), (0, pad_cols)))

    weight_mode = pl.Buffered(1) if single_buffer_weights else None

    def const_spec(shape, n_grid_axes):
        idx = (lambda i: (0, 0)) if n_grid_axes == 1 else (lambda i, k: (0, 0))
        if weight_mode is not None:
            return pl.BlockSpec(shape, idx, pipeline_mode=weight_mode)
        return pl.BlockSpec(shape, idx)

    if not k_tiled:
        grid = (b_pad // tb,)
        dims = ("parallel",)
        # NOTE: if the x DMA is exposed for very wide inputs, pipeline_mode=pl.Buffered(3)
        # on this spec is the knob to sweep (weights are single-buffered already).
        in_specs = [pl.BlockSpec((tb, x.shape[1]), lambda i: (i, 0))]
        in_specs += [const_spec(op.shape, 1) for op in weights]
        out_spec = pl.BlockSpec((tb, head_pad), lambda i: (i, 0))
        scratch = []
        kernel = _make_fused_encoder_kernel(n_hidden)
        streamed_vmem = 2 * tb * x.shape[1] * x_itemsize
        resident_ops = weights
    else:
        tk, k_pad = prepared["tk"], prepared["k_pad"]
        h0_pad = widths[0]
        grid = (b_pad // tb, k_pad // tk)
        dims = ("parallel", "arbitrary")
        in_specs = [
            pl.BlockSpec((tb, tk), lambda i, k: (i, k)),      # streamed input tile
            pl.BlockSpec((tk, h0_pad), lambda i, k: (k, 0)),  # streamed layer-0 weight
        ]
        in_specs += [const_spec(op.shape, 2) for op in weights[1:]]
        out_spec = pl.BlockSpec((tb, head_pad), lambda i, k: (i, 0))
        scratch = [pltpu.VMEM((tb, h0_pad), jnp.float32)]     # f32 accumulator
        kernel = _make_ktiled_encoder_kernel(n_hidden)
        streamed_vmem = 2 * (tb * tk * x_itemsize + tk * h0_pad * 2) + tb * h0_pad * 4
        resident_ops = weights[1:]

    # VMEM budget: resident weights (1 or 2 buffers) + streamed tiles + output tile
    # + in-kernel activation temporaries + compiler scratch headroom.
    resident_bytes = sum(int(op.size) * op.dtype.itemsize for op in resident_ops)
    n_weight_bufs = 1 if single_buffer_weights else 2
    max_width = max(widths + [x.shape[1]])
    vmem_needed = (n_weight_bufs * resident_bytes
                   + streamed_vmem
                   + 2 * tb * head_pad * 4
                   + tb * max_width * 12
                   + (4 << 20))
    vmem_limit = int(min(max(vmem_needed, 32 << 20), budget))

    # advisory cost estimate (now includes the streamed input bytes)
    flops = 0
    fan_in = prepared["k_pad"] if k_tiled else x.shape[1]
    for fo in widths:
        flops += 2 * b_pad * fan_in * fo
        fan_in = fo
    param_bytes = sum(int(op.size) * op.dtype.itemsize for op in weights)
    bytes_accessed = (b_pad * x.shape[1] * x_itemsize + param_bytes
                      + b_pad * head_pad * 4)

    out = pl.pallas_call(
        kernel,
        out_shape=jax.ShapeDtypeStruct((b_pad, head_pad), jnp.float32),
        grid=grid,
        in_specs=in_specs,
        out_specs=out_spec,
        scratch_shapes=scratch,
        compiler_params=pltpu.CompilerParams(
            dimension_semantics=dims,
            vmem_limit_bytes=vmem_limit,
        ),
        cost_estimate=pl.CostEstimate(
            flops=int(flops),
            transcendentals=0,
            bytes_accessed=int(bytes_accessed),
        ),
    )(x, *weights)

    mu = out[:batch, :latent]
    logvar = out[:batch, latent:2 * latent]
    return mu, logvar


def encode(prepared, spikes):
    """Forward with graceful fallback if pl.Buffered(1) is unsupported on this build."""
    try:
        return linear_encoder_forward(prepared, spikes, single_buffer_weights=True)
    except Exception:
        # fall back to default double-buffered weights (identical semantics)
        return linear_encoder_forward(prepared, spikes, single_buffer_weights=False)


# ----------------------------------------------------------------------------
# Parameter init (mirrors torch.nn.Linear: U(-1/sqrt(fan_in), 1/sqrt(fan_in)))
# ----------------------------------------------------------------------------
def init_linear(key, fan_in, fan_out):
    kw, kb = jax.random.split(key)
    bound = 1.0 / math.sqrt(fan_in)
    w = jax.random.uniform(kw, (fan_in, fan_out), jnp.float32, -bound, bound)
    b = jax.random.uniform(kb, (1, fan_out), jnp.float32, -bound, bound)
    return w, b


def init_linear_encoder_params(key, n_inputs, hidden_dims, latent_dim):
    dims = [n_inputs] + list(hidden_dims)
    params = {"layers": []}
    for i in range(len(dims) - 1):
        key, sub = jax.random.split(key)
        params["layers"].append(init_linear(sub, dims[i], dims[i + 1]))
    key, k_mu = jax.random.split(key)
    key, k_var = jax.random.split(key)
    params["fc_mu"] = init_linear(k_mu, dims[-1], latent_dim)
    params["fc_var"] = init_linear(k_var, dims[-1], latent_dim)
    return params


# ----------------------------------------------------------------------------
# Reference (pure JAX, f32)
# ----------------------------------------------------------------------------
def linear_encoder_ref(params, spikes):
    batch = spikes.shape[0]
    out = spikes.reshape(batch, -1).astype(jnp.float32)
    for (w, b) in params["layers"]:
        y = out @ w + b
        out = jnp.where(y > 0, y, _NEG_SLOPE * y)
    mu = out @ params["fc_mu"][0] + params["fc_mu"][1]
    logvar = out @ params["fc_var"][0] + params["fc_var"][1]
    return mu, logvar


if __name__ == "__main__":
    key = jax.random.PRNGKey(0)

    # --- 1) small shapes from the module spec: spikes [batch, n_neurons, n_timesteps]
    batch, n_neurons, n_timesteps = 2, 4, 16
    hidden_dims, latent_dim = [32, 32], 8
    n_inputs = n_neurons * n_timesteps

    key, k_params, k_spikes = jax.random.split(key, 3)
    params = init_linear_encoder_params(k_params, n_inputs, hidden_dims, latent_dim)
    spikes = (jax.random.uniform(k_spikes, (batch, n_neurons, n_timesteps)) < 0.3
              ).astype(jnp.float32)

    prepared = prepare_encoder_params(params)     # pad/cast ONCE, not per call
    mu, logvar = encode(prepared, spikes)
    mu = jax.block_until_ready(mu)
    logvar = jax.block_until_ready(logvar)

    mu_ref, logvar_ref = linear_encoder_ref(params, spikes)
    assert mu.shape == (batch, latent_dim) and logvar.shape == (batch, latent_dim)
    # bf16 matmuls with f32 accumulation -> loosened tolerance vs the f32 reference
    assert jnp.allclose(mu, mu_ref, atol=2e-2, rtol=2e-2)
    assert jnp.allclose(logvar, logvar_ref, atol=2e-2, rtol=2e-2)

    # --- 2) exercise the K-tiled first-layer path (the one large-n_inputs / v7x takes)
    batch2, n_neurons2, n_timesteps2 = 16, 10, 30
    hidden_dims2, latent_dim2 = [32], 8
    key, k_params2, k_spikes2 = jax.random.split(key, 3)
    params2 = init_linear_encoder_params(
        k_params2, n_neurons2 * n_timesteps2, hidden_dims2, latent_dim2)
    spikes2 = (jax.random.uniform(k_spikes2, (batch2, n_neurons2, n_timesteps2)) < 0.3
               ).astype(jnp.float32)

    prepared2 = prepare_encoder_params(params2, force_k_tiling=True, k_tile=128)
    mu2, logvar2 = encode(prepared2, spikes2)
    mu2 = jax.block_until_ready(mu2)
    logvar2 = jax.block_until_ready(logvar2)

    mu2_ref, logvar2_ref = linear_encoder_ref(params2, spikes2)
    assert mu2.shape == (batch2, latent_dim2) and logvar2.shape == (batch2, latent_dim2)
    assert jnp.allclose(mu2, mu2_ref, atol=2e-2, rtol=2e-2)
    assert jnp.allclose(logvar2, logvar2_ref, atol=2e-2, rtol=2e-2)

    print("KERNEL_OK")
</pallas_src>

<mosaic_0001>
module attributes {stable_mosaic.version = 11 : i64} {
  func.func @kernel(%arg0: i32, %arg1: memref<8x64xf32, #tpu.memory_space<vmem>>, %arg2: memref<64x128xbf16, #tpu.memory_space<vmem>>, %arg3: memref<1x128xf32, #tpu.memory_space<vmem>>, %arg4: memref<128x128xbf16, #tpu.memory_space<vmem>>, %arg5: memref<1x128xf32, #tpu.memory_space<vmem>>, %arg6: memref<128x128xbf16, #tpu.memory_space<vmem>>, %arg7: memref<1x128xf32, #tpu.memory_space<vmem>>, %arg8: memref<8x128xf32, #tpu.memory_space<vmem>>) attributes {dimension_semantics = [#tpu.dimension_semantics<parallel>], iteration_bounds = array<i64: 1>, scalar_prefetch = 0 : i64, scratch_operands = 0 : i64, tpu.core_type = #tpu.core_type<tc>, window_params = [{transform_indices = @transform_0, window_bounds = array<i64: 8, 64>}, {pipeline_mode = #tpu.pipeline_mode<synchronous>, transform_indices = @transform_1, window_bounds = array<i64: 64, 128>}, {pipeline_mode = #tpu.pipeline_mode<synchronous>, transform_indices = @transform_2, window_bounds = array<i64: 1, 128>}, {pipeline_mode = #tpu.pipeline_mode<synchronous>, transform_indices = @transform_3, window_bounds = array<i64: 128, 128>}, {pipeline_mode = #tpu.pipeline_mode<synchronous>, transform_indices = @transform_4, window_bounds = array<i64: 1, 128>}, {pipeline_mode = #tpu.pipeline_mode<synchronous>, transform_indices = @transform_5, window_bounds = array<i64: 128, 128>}, {pipeline_mode = #tpu.pipeline_mode<synchronous>, transform_indices = @transform_6, window_bounds = array<i64: 1, 128>}, {transform_indices = @transform_7, window_bounds = array<i64: 8, 128>}]} {
    %c0 = arith.constant 0 : index
    %c0_0 = arith.constant 0 : index
    %0 = vector.load %arg1[%c0, %c0_0] : memref<8x64xf32, #tpu.memory_space<vmem>>, vector<8x64xf32>
    %1 = arith.truncf %0 : vector<8x64xf32> to vector<8x64xbf16>
    %c0_1 = arith.constant 0 : index
    %c0_2 = arith.constant 0 : index
    %2 = vector.load %arg2[%c0_1, %c0_2] : memref<64x128xbf16, #tpu.memory_space<vmem>>, vector<64x128xbf16>
    %c0_3 = arith.constant 0 : index
    %c0_4 = arith.constant 0 : index
    %3 = vector.load %arg3[%c0_3, %c0_4] : memref<1x128xf32, #tpu.memory_space<vmem>>, vector<1x128xf32>
    %cst = arith.constant dense<0.000000e+00> : vector<8x128xf32>
    %4 = tpu.matmul %1, %2, %cst {dimension_numbers = #tpu.dot_dimension_numbers<[1], [0], [0], [1], [0, 0, 1, 1], [], []>} : vector<8x64xbf16>, vector<64x128xbf16>, vector<8x128xf32> -> vector<8x128xf32>
    %5 = vector.broadcast %3 : vector<1x128xf32> to vector<8x128xf32>
    %6 = arith.addf %4, %5 : vector<8x128xf32>
    %cst_5 = arith.constant 0.000000e+00 : f32
    %7 = vector.broadcast %cst_5 : f32 to vector<8x128xf32>
    %8 = arith.cmpf ogt, %6, %7 : vector<8x128xf32>
    %cst_6 = arith.constant 0.00999999977 : f32
    %9 = vector.broadcast %cst_6 : f32 to vector<8x128xf32>
    %10 = arith.mulf %9, %6 : vector<8x128xf32>
    %11 = arith.select %8, %6, %10 : vector<8x128xi1>, vector<8x128xf32>
    %12 = arith.truncf %11 : vector<8x128xf32> to vector<8x128xbf16>
    %c0_7 = arith.constant 0 : index
    %c0_8 = arith.constant 0 : index
    %13 = vector.load %arg4[%c0_7, %c0_8] : memref<128x128xbf16, #tpu.memory_space<vmem>>, vector<128x128xbf16>
    %c0_9 = arith.constant 0 : index
    %c0_10 = arith.constant 0 : index
    %14 = vector.load %arg5[%c0_9, %c0_10] : memref<1x128xf32, #tpu.memory_space<vmem>>, vector<1x128xf32>
    %cst_11 = arith.constant dense<0.000000e+00> : vector<8x128xf32>
    %15 = tpu.matmul %12, %13, %cst_11 {dimension_numbers = #tpu.dot_dimension_numbers<[1], [0], [0], [1], [0, 0, 1, 1], [], []>} : vector<8x128xbf16>, vector<128x128xbf16>, vector<8x128xf32> -> vector<8x128xf32>
    %16 = vector.broadcast %14 : vector<1x128xf32> to vector<8x128xf32>
    %17 = arith.addf %15, %16 : vector<8x128xf32>
    %cst_12 = arith.constant 0.000000e+00 : f32
    %18 = vector.broadcast %cst_12 : f32 to vector<8x128xf32>
    %19 = arith.cmpf ogt, %17, %18 : vector<8x128xf32>
    %cst_13 = arith.constant 0.00999999977 : f32
    %20 = vector.broadcast %cst_13 : f32 to vector<8x128xf32>
    %21 = arith.mulf %20, %17 : vector<8x128xf32>
    %22 = arith.select %19, %17, %21 : vector<8x128xi1>, vector<8x128xf32>
    %23 = arith.truncf %22 : vector<8x128xf32> to vector<8x128xbf16>
    %c0_14 = arith.constant 0 : index
    %c0_15 = arith.constant 0 : index
    %24 = vector.load %arg6[%c0_14, %c0_15] : memref<128x128xbf16, #tpu.memory_space<vmem>>, vector<128x128xbf16>
    %c0_16 = arith.constant 0 : index
    %c0_17 = arith.constant 0 : index
    %25 = vector.load %arg7[%c0_16, %c0_17] : memref<1x128xf32, #tpu.memory_space<vmem>>, vector<1x128xf32>
    %cst_18 = arith.constant dense<0.000000e+00> : vector<8x128xf32>
    %26 = tpu.matmul %23, %24, %cst_18 {dimension_numbers = #tpu.dot_dimension_numbers<[1], [0], [0], [1], [0, 0, 1, 1], [], []>} : vector<8x128xbf16>, vector<128x128xbf16>, vector<8x128xf32> -> vector<8x128xf32>
    %27 = vector.broadcast %25 : vector<1x128xf32> to vector<8x128xf32>
    %28 = arith.addf %26, %27 : vector<8x128xf32>
    %c0_19 = arith.constant 0 : index
    %c0_20 = arith.constant 0 : index
    %29 = vector.load %arg8[%c0_19, %c0_20] : memref<8x128xf32, #tpu.memory_space<vmem>>, vector<8x128xf32>
    tpu.vector_store %arg8[%c0_19, %c0_20], %28 {strides = array<i32>} : memref<8x128xf32, #tpu.memory_space<vmem>>, vector<8x128xf32>,
    return
  }
  func.func @transform_0(%arg0: i32) -> (i32, i32) {
    %c0_i32 = arith.constant 0 : i32
    %c0_i32_0 = arith.constant 0 : i32
    return %arg0, %c0_i32 : i32, i32
  }
  func.func @transform_1(%arg0: i32) -> (i32, i32) {
    %c0_i32 = arith.constant 0 : i32
    %c0_i32_0 = arith.constant 0 : i32
    %c0_i32_1 = arith.constant 0 : i32
    return %c0_i32, %c0_i32_0 : i32, i32
  }
  func.func @transform_2(%arg0: i32) -> (i32, i32) {
    %c0_i32 = arith.constant 0 : i32
    %c0_i32_0 = arith.constant 0 : i32
    %c0_i32_1 = arith.constant 0 : i32
    return %c0_i32, %c0_i32_0 : i32, i32
  }
  func.func @transform_3(%arg0: i32) -> (i32, i32) {
    %c0_i32 = arith.constant 0 : i32
    %c0_i32_0 = arith.constant 0 : i32
    %c0_i32_1 = arith.constant 0 : i32
    return %c0_i32, %c0_i32_0 : i32, i32
  }
  func.func @transform_4(%arg0: i32) -> (i32, i32) {
    %c0_i32 = arith.constant 0 : i32
    %c0_i32_0 = arith.constant 0 : i32
    %c0_i32_1 = arith.constant 0 : i32
    return %c0_i32, %c0_i32_0 : i32, i32
  }
  func.func @transform_5(%arg0: i32) -> (i32, i32) {
    %c0_i32 = arith.constant 0 : i32
    %c0_i32_0 = arith.constant 0 : i32
    %c0_i32_1 = arith.constant 0 : i32
    return %c0_i32, %c0_i32_0 : i32, i32
  }
  func.func @transform_6(%arg0: i32) -> (i32, i32) {
    %c0_i32 = arith.constant 0 : i32
    %c0_i32_0 = arith.constant 0 : i32
    %c0_i32_1 = arith.constant 0 : i32
    return %c0_i32, %c0_i32_0 : i32, i32
  }
  func.func @transform_7(%arg0: i32) -> (i32, i32) {
    %c0_i32 = arith.constant 0 : i32
    %c0_i32_0 = arith.constant 0 : i32
    return %arg0, %c0_i32 : i32, i32
  }
}

module attributes {stable_mosaic.version = 11 : i64} {
  func.func @kernel(%arg0: i32, %arg1: memref<8x64xf32, #tpu.memory_space<vmem>>, %arg2: memref<64x128xbf16, #tpu.memory_space<vmem>>, %arg3: memref<1x128xf32, #tpu.memory_space<vmem>>, %arg4: memref<128x128xbf16, #tpu.memory_space<vmem>>, %arg5: memref<1x128xf32, #tpu.memory_space<vmem>>, %arg6: memref<128x128xbf16, #tpu.memory_space<vmem>>, %arg7: memref<1x128xf32, #tpu.memory_space<vmem>>, %arg8: memref<8x128xf32, #tpu.memory_space<vmem>>) attributes {dimension_semantics = [#tpu.dimension_semantics<parallel>], iteration_bounds = array<i64: 1>, scalar_prefetch = 0 : i64, scratch_operands = 0 : i64, tpu.core_type = #tpu.core_type<tc>, window_params = [{transform_indices = @transform_0, window_bounds = array<i64: 8, 64>}, {pipeline_mode = #tpu.pipeline_mode<synchronous>, transform_indices = @transform_1, window_bounds = array<i64: 64, 128>}, {pipeline_mode = #tpu.pipeline_mode<synchronous>, transform_indices = @transform_2, window_bounds = array<i64: 1, 128>}, {pipeline_mode = #tpu.pipeline_mode<synchronous>, transform_indices = @transform_3, window_bounds = array<i64: 128, 128>}, {pipeline_mode = #tpu.pipeline_mode<synchronous>, transform_indices = @transform_4, window_bounds = array<i64: 1, 128>}, {pipeline_mode = #tpu.pipeline_mode<synchronous>, transform_indices = @transform_5, window_bounds = array<i64: 128, 128>}, {pipeline_mode = #tpu.pipeline_mode<synchronous>, transform_indices = @transform_6, window_bounds = array<i64: 1, 128>}, {transform_indices = @transform_7, window_bounds = array<i64: 8, 128>}]} {
    %c0 = arith.constant 0 : index
    %c0_0 = arith.constant 0 : index
    %0 = vector.load %arg1[%c0, %c0_0] : memref<8x64xf32, #tpu.memory_space<vmem>>, vector<8x64xf32>
    %1 = arith.truncf %0 : vector<8x64xf32> to vector<8x64xbf16>
    %c0_1 = arith.constant 0 : index
    %c0_2 = arith.constant 0 : index
    %2 = vector.load %arg2[%c0_1, %c0_2] : memref<64x128xbf16, #tpu.memory_space<vmem>>, vector<64x128xbf16>
    %c0_3 = arith.constant 0 : index
    %c0_4 = arith.constant 0 : index
    %3 = vector.load %arg3[%c0_3, %c0_4] : memref<1x128xf32, #tpu.memory_space<vmem>>, vector<1x128xf32>
    %cst = arith.constant dense<0.000000e+00> : vector<8x128xf32>
    %4 = tpu.matmul %1, %2, %cst {dimension_numbers = #tpu.dot_dimension_numbers<[1], [0], [0], [1], [0, 0, 1, 1], [], []>} : vector<8x64xbf16>, vector<64x128xbf16>, vector<8x128xf32> -> vector<8x128xf32>
    %5 = vector.broadcast %3 : vector<1x128xf32> to vector<8x128xf32>
    %6 = arith.addf %4, %5 : vector<8x128xf32>
    %cst_5 = arith.constant 0.000000e+00 : f32
    %7 = vector.broadcast %cst_5 : f32 to vector<8x128xf32>
    %8 = arith.cmpf ogt, %6, %7 : vector<8x128xf32>
    %cst_6 = arith.constant 0.00999999977 : f32
    %9 = vector.broadcast %cst_6 : f32 to vector<8x128xf32>
    %10 = arith.mulf %9, %6 : vector<8x128xf32>
    %11 = arith.select %8, %6, %10 : vector<8x128xi1>, vector<8x128xf32>
    %12 = arith.truncf %11 : vector<8x128xf32> to vector<8x128xbf16>
    %c0_7 = arith.constant 0 : index
    %c0_8 = arith.constant 0 : index
    %13 = vector.load %arg4[%c0_7, %c0_8] : memref<128x128xbf16, #tpu.memory_space<vmem>>, vector<128x128xbf16>
    %c0_9 = arith.constant 0 : index
    %c0_10 = arith.constant 0 : index
    %14 = vector.load %arg5[%c0_9, %c0_10] : memref<1x128xf32, #tpu.memory_space<vmem>>, vector<1x128xf32>
    %cst_11 = arith.constant dense<0.000000e+00> : vector<8x128xf32>
    %15 = tpu.matmul %12, %13, %cst_11 {dimension_numbers = #tpu.dot_dimension_numbers<[1], [0], [0], [1], [0, 0, 1, 1], [], []>} : vector<8x128xbf16>, vector<128x128xbf16>, vector<8x128xf32> -> vector<8x128xf32>
    %16 = vector.broadcast %14 : vector<1x128xf32> to vector<8x128xf32>
    %17 = arith.addf %15, %16 : vector<8x128xf32>
    %cst_12 = arith.constant 0.000000e+00 : f32
    %18 = vector.broadcast %cst_12 : f32 to vector<8x128xf32>
    %19 = arith.cmpf ogt, %17, %18 : vector<8x128xf32>
    %cst_13 = arith.constant 0.00999999977 : f32
    %20 = vector.broadcast %cst_13 : f32 to vector<8x128xf32>
    %21 = arith.mulf %20, %17 : vector<8x128xf32>
    %22 = arith.select %19, %17, %21 : vector<8x128xi1>, vector<8x128xf32>
    %23 = arith.truncf %22 : vector<8x128xf32> to vector<8x128xbf16>
    %c0_14 = arith.constant 0 : index
    %c0_15 = arith.constant 0 : index
    %24 = vector.load %arg6[%c0_14, %c0_15] : memref<128x128xbf16, #tpu.memory_space<vmem>>, vector<128x128xbf16>
    %c0_16 = arith.constant 0 : index
    %c0_17 = arith.constant 0 : index
    %25 = vector.load %arg7[%c0_16, %c0_17] : memref<1x128xf32, #tpu.memory_space<vmem>>, vector<1x128xf32>
    %cst_18 = arith.constant dense<0.000000e+00> : vector<8x128xf32>
    %26 = tpu.matmul %23, %24, %cst_18 {dimension_numbers = #tpu.dot_dimension_numbers<[1], [0], [0], [1], [0, 0, 1, 1], [], []>} : vector<8x128xbf16>, vector<128x128xbf16>, vector<8x128xf32> -> vector<8x128xf32>
    %27 = vector.broadcast %25 : vector<1x128xf32> to vector<8x128xf32>
    %28 = arith.addf %26, %27 : vector<8x128xf32>
    %c0_19 = arith.constant 0 : index
    %c0_20 = arith.constant 0 : index
    %29 = vector.load %arg8[%c0_19, %c0_20] : memref<8x128xf32, #tpu.memory_space<vmem>>, vector<8x128xf32>
    tpu.vector_store %arg8[%c0_19, %c0_20], %28 {strides = array<i32>} : memref<8x128xf32, #tpu.memory_space<vmem>>, vector<8x128xf32>,
    return
  }
  func.func @transform_0(%arg0: i32) -> (i32, i32) {
    %c0_i32 = arith.constant 0 : i32
    %c0_i32_0 = arith.constant 0 : i32
    return %arg0, %c0_i32 : i32, i32
  }
  func.func @transform_1(%arg0: i32) -> (i32, i32) {
    %c0_i32 = arith.constant 0 : i32
    %c0_i32_0 = arith.constant 0 : i32
    %c0_i32_1 = arith.constant 0 : i32
    return %c0_i32, %c0_i32_0 : i32, i32
  }
  func.func @transform_2(%arg0: i32) -> (i32, i32) {
    %c0_i32 = arith.constant 0 : i32
    %c0_i32_0 = arith.constant 0 : i32
    %c0_i32_1 = arith.constant 0 : i32
    return %c0_i32, %c0_i32_0 : i32, i32
  }
  func.func @transform_3(%arg0: i32) -> (i32, i32) {
    %c0_i32 = arith.constant 0 : i32
    %c0_i32_0 = arith.constant 0 : i32
    %c0_i32_1 = arith.constant 0 : i32
    return %c0_i32, %c0_i32_0 : i32, i32
  }
  func.func @transform_4(%arg0: i32) -> (i32, i32) {
    %c0_i32 = arith.constant 0 : i32
    %c0_i32_0 = arith.constant 0 : i32
    %c0_i32_1 = arith.constant 0 : i32
    return %c0_i32, %c0_i32_0 : i32, i32
  }
  func.func @transform_5(%arg0: i32) -> (i32, i32) {
    %c0_i32 = arith.constant 0 : i32
    %c0_i32_0 = arith.constant 0 : i32
    %c0_i32_1 = arith.constant 0 : i32
    return %c0_i32, %c0_i32_0 : i32, i32
  }
  func.func @transform_6(%arg0: i32) -> (i32, i32) {
    %c0_i32 = arith.constant 0 : i32
    %c0_i32_0 = arith.constant 0 : i32
    %c0_i32_1 = arith.constant 0 : i32
    return %c0_i32, %c0_i32_0 : i32, i32
  }
  func.func @transform_7(%arg0: i32) -> (i32, i32) {
    %c0_i32 = arith.constant 0 : i32
    %c0_i32_0 = arith.constant 0 : i32
    return %arg0, %c0_i32 : i32, i32
  }
}

</mosaic_0001>

<llo_original>
// kernel: tpu_custom_call.1
$region0: #{tpu_custom_call.1}
  #allocation0 [shape = 'u32[]', space=smem, size = 0x4, offset = 0x4, fixed_abs, tag = 'smem constant byte address 0x4 - core index']
  #allocation1 [shape = 'u32[144,128]{1,0:T(1,128)}', space=vmem, size = 0x12000, scoped, tag = 'internal scratch']
  %s0 = inlined_call_operand.hbm [shape: f32[8,64], index: 0, kind: input, shape index: {}]
  %s1 = inlined_call_operand.hbm [shape: bf16[64,128], index: 1, kind: input, shape index: {}]
  %s2 = inlined_call_operand.vmem [shape: f32[1,128], index: 2, kind: input, shape index: {}]
  %s3 = inlined_call_operand.hbm [shape: bf16[128,128], index: 3, kind: input, shape index: {}]
  %s4 = inlined_call_operand.vmem [shape: f32[1,128], index: 4, kind: input, shape index: {}]
  %s5 = inlined_call_operand.hbm [shape: bf16[128,128], index: 5, kind: input, shape index: {}]
  %s6 = inlined_call_operand.vmem [shape: f32[1,128], index: 6, kind: input, shape index: {}]
  %s7 = inlined_call_operand.hbm [shape: f32[8,128], index: 7, kind: output, shape index: {}]
  %s8 = sld [smem:[#allocation0]]
  $region54: #{tpu_custom_call.1} parent=0
    _
  %s10 = ssub.s32 1, %s8
  %s11 = scalar_select 0, %s10, %s8
  $region1: #{tpu_custom_call.1} parent=0
    #allocation2 [shape = 'u8[4096]{0}', space=vmem, size = 0x1000, scoped, tag = 'input window, operand 0, single buffered']
    #allocation3 [shape = 's32[1]{0}', space=sflag, size = 0x4, scoped, tag = 'scoped memory for tpu_custom_call.1']
    #allocation4 [shape = 's32[1]{0}', space=sflag, size = 0x4, scoped, tag = 'scoped memory for tpu_custom_call.1']
    #allocation5 [shape = 'u8[16384]{0}', space=vmem, size = 0x4000, scoped, tag = 'input window, operand 1, single buffered']
    #allocation6 [shape = 's32[1]{0}', space=sflag, size = 0x4, scoped, tag = 'scoped memory for tpu_custom_call.1']
    #allocation7 [shape = 'u8[32768]{0}', space=vmem, size = 0x8000, scoped, tag = 'input window, operand 3, single buffered']
    #allocation8 [shape = 'u8[32768]{0}', space=vmem, size = 0x8000, scoped, tag = 'input window, operand 5, single buffered']
    #allocation9 [shape = 's32[1]{0}', space=sflag, size = 0x4, scoped, tag = 'scoped memory for tpu_custom_call.1']
    #allocation10 [shape = 'u8[4096]{0}', space=vmem, size = 0x1000, scoped, tag = 'output window, operand 0, single buffered']
    %12 = vsyncpa [#allocation3], 0
    %13 = vsyncpa [#allocation6], 0
    %14 = vsyncpa [#allocation9], 0
    %15 = vsyncpa [#allocation4], 0
    // Predicated region
    $region2: #{tpu_custom_call.1} parent=1 // pred_check
      _
    $region3: #{tpu_custom_call.1} parent=1 // pred_check_branch
      %17 = sbr.rel (0) target = $region5
    $region4: #{tpu_custom_call.1} parent=1 // pred_region
      %s19 = ssub.s32 128, 128
      %20 = vsyncadd [#allocation3], %s19
      %s22 = sshll.u32 [#allocation2], 4
      %s23 = int_to_ptr.vmem [resolvable:$true] %s22
      %25 = dma.hbm_to_vmem [thread:$0]  %s0, 128, %s23, [#allocation3]
    $region5: #{tpu_custom_call.1} parent=1 // pred_fallthru
      _
    // Predicated region
    $region6: #{tpu_custom_call.1} parent=1 // pred_check
      _
    $region7: #{tpu_custom_call.1} parent=1 // pred_check_branch
      %27 = sbr.rel (0) target = $region9
    $region8: #{tpu_custom_call.1} parent=1 // pred_region
      %s29 = ssub.s32 512, 512
      %30 = vsyncadd [#allocation6], %s29
      %s31 = sshll.u32 [#allocation5], 4
      %s32 = int_to_ptr.vmem [resolvable:$true] %s31
      %37 = dma.hbm_to_vmem [thread:$0]  %s1, 512, %s32, [#allocation6], 64, 64, 4
    $region9: #{tpu_custom_call.1} parent=1 // pred_fallthru
      _
    // Predicated region
    $region10: #{tpu_custom_call.1} parent=1 // pred_check
      _
    $region11: #{tpu_custom_call.1} parent=1 // pred_check_branch
      %39 = sbr.rel (0) target = $region13
    $region12: #{tpu_custom_call.1} parent=1 // pred_region
      _
    $region13: #{tpu_custom_call.1} parent=1 // pred_fallthru
      _
    // Predicated region
    $region14: #{tpu_custom_call.1} parent=1 // pred_check
      _
    $region15: #{tpu_custom_call.1} parent=1 // pred_check_branch
      %41 = sbr.rel (0) target = $region17
    $region16: #{tpu_custom_call.1} parent=1 // pred_region
      %s43 = ssub.s32 1024, 1024
      %44 = vsyncadd [#allocation6], %s43
      %s45 = sshll.u32 [#allocation7], 4
      %s46 = int_to_ptr.vmem [resolvable:$true] %s45
      %51 = dma.hbm_to_vmem [thread:$0]  %s3, 1024, %s46, [#allocation6], 64, 64, 4
    $region17: #{tpu_custom_call.1} parent=1 // pred_fallthru
      _
    // Predicated region
    $region18: #{tpu_custom_call.1} parent=1 // pred_check
      _
    $region19: #{tpu_custom_call.1} parent=1 // pred_check_branch
      %53 = sbr.rel (0) target = $region21
    $region20: #{tpu_custom_call.1} parent=1 // pred_region
      _
    $region21: #{tpu_custom_call.1} parent=1 // pred_fallthru
      _
    // Predicated region
    $region22: #{tpu_custom_call.1} parent=1 // pred_check
      _
    $region23: #{tpu_custom_call.1} parent=1 // pred_check_branch
      %55 = sbr.rel (0) target = $region25
    $region24: #{tpu_custom_call.1} parent=1 // pred_region
      %s57 = ssub.s32 1024, 1024
      %58 = vsyncadd [#allocation9], %s57
      %s59 = sshll.u32 [#allocation8], 4
      %s60 = int_to_ptr.vmem [resolvable:$true] %s59
      %65 = dma.hbm_to_vmem [thread:$0]  %s5, 1024, %s60, [#allocation9], 64, 64, 4
    $region25: #{tpu_custom_call.1} parent=1 // pred_fallthru
      _
    // Predicated region
    $region26: #{tpu_custom_call.1} parent=1 // pred_check
      _
    $region27: #{tpu_custom_call.1} parent=1 // pred_check_branch
      %67 = sbr.rel (0) target = $region29
    $region28: #{tpu_custom_call.1} parent=1 // pred_region
      _
    $region29: #{tpu_custom_call.1} parent=1 // pred_fallthru
      _
    // Predicated region
    $region30: #{tpu_custom_call.1} parent=1 // pred_check
      _
    $region31: #{tpu_custom_call.1} parent=1 // pred_check_branch
      %69 = sbr.rel (0) target = $region33
    $region32: #{tpu_custom_call.1} parent=1 // pred_region
      %70 = dma.done [#allocation3], 128
    $region33: #{tpu_custom_call.1} parent=1 // pred_fallthru
      _
    // Predicated region
    $region34: #{tpu_custom_call.1} parent=1 // pred_check
      _
    $region35: #{tpu_custom_call.1} parent=1 // pred_check_branch
      %72 = sbr.rel (0) target = $region37
    $region36: #{tpu_custom_call.1} parent=1 // pred_region
      %73 = dma.done [#allocation6], 512
    $region37: #{tpu_custom_call.1} parent=1 // pred_fallthru
      _
    // Predicated region
    $region38: #{tpu_custom_call.1} parent=1 // pred_check
      _
    $region39: #{tpu_custom_call.1} parent=1 // pred_check_branch
      %75 = sbr.rel (0) target = $region41
    $region40: #{tpu_custom_call.1} parent=1 // pred_region
      %76 = dma.done [#allocation6], 1024
    $region41: #{tpu_custom_call.1} parent=1 // pred_fallthru
      _
    // Predicated region
    $region42: #{tpu_custom_call.1} parent=1 // pred_check
      _
    $region43: #{tpu_custom_call.1} parent=1 // pred_check_branch
      %78 = sbr.rel (0) target = $region45
    $region44: #{tpu_custom_call.1} parent=1 // pred_region
      %79 = dma.done [#allocation9], 1024
    $region45: #{tpu_custom_call.1} parent=1 // pred_fallthru
      _
    %v81 = vld [vmem:[#allocation2] sm:$0xff]
    %v82 = vpack.c.bf16 %v81, %v81
    %v83 = vld [vmem:[#allocation5] sm:$0xf]
    %v84 = vld [vmem:[#allocation5 + $0x4] sm:$0xf]
    %v85 = vld [vmem:[#allocation5 + $0x8] sm:$0xf]
    %v86 = vld [vmem:[#allocation5 + $0xc] sm:$0xf]
    %v87 = vld [vmem:[#allocation5 + $0x10] sm:$0xf]
    %v88 = vld [vmem:[#allocation5 + $0x14] sm:$0xf]
    %v89 = vld [vmem:[#allocation5 + $0x18] sm:$0xf]
    %v90 = vld [vmem:[#allocation5 + $0x1c] sm:$0xf]
    %v91 = vld [vmem:[%s2] sm:$0x1]
    %v93 = vlaneseq
    %v94 = vshrl.u32 %v93, 7
    %v95 = vsub.s32 0, %v94
    %v96 = vrot.slane %v91, %v95
    %v106 = vunpack.c.l.b16 %v83
    %v107 = vunpack.c.l.b16 %v84
    %v108 = vunpack.c.l.b16 %v85
    %v109 = vunpack.c.l.b16 %v86
    %v110 = vunpack.c.l.b16 %v87
    %v111 = vunpack.c.l.b16 %v88
    %v112 = vunpack.c.l.b16 %v89
    %v113 = vunpack.c.l.b16 %v90
    %v114 = vpack.c.b16 %v107, %v106
    %v115 = vpack.c.b16 %v109, %v108
    %v116 = vpack.c.b16 %v111, %v110
    %v117 = vpack.c.b16 %v113, %v112
    %vm122 = vcmask 523264
    %v124 = vsel %vm122, %v82, 0
    %126 = vmatprep.subr.bf16.mxu0 0
    %127 = vmatpush1.bf16.msra.mxu0 0
    %128 = vmatprep.subr.bf16.mxu0 0
    %129 = vmatpush1.bf16.msra.mxu0 0
    %130 = vmatprep.subr.bf16.mxu0 0
    %131 = vmatpush1.bf16.msra.mxu0 0
    %132 = vmatprep.subr.bf16.mxu0 0
    %133 = vmatpush1.bf16.msra.mxu0 0
    %134 = vmatprep.subr.bf16.mxu0 0
    %135 = vmatpush1.bf16.msra.mxu0 %v117
    %136 = vmatprep.subr.bf16.mxu0 0
    %137 = vmatpush1.bf16.msra.mxu0 %v116
    %138 = vmatprep.subr.bf16.mxu0 0
    %139 = vmatpush1.bf16.msra.mxu0 %v115
    %140 = vmatprep.subr.bf16.mxu0 0
    %141 = vmatpush1.bf16.msra.mxu0 %v114
    %142 = vmatprep.subr.bf16.mxu0 0
    %143 = vmatpush2.bf16.msra.mxu0 0
    %144 = vmatprep.subr.bf16.mxu0 0
    %145 = vmatpush2.bf16.msra.mxu0 0
    %146 = vmatprep.subr.bf16.mxu0 0
    %147 = vmatpush2.bf16.msra.mxu0 0
    %148 = vmatprep.subr.bf16.mxu0 0
    %149 = vmatpush2.bf16.msra.mxu0 0
    %150 = vmatprep.subr.bf16.mxu0 0
    %151 = vmatpush2.bf16.msra.mxu0 0
    %152 = vmatprep.subr.bf16.mxu0 0
    %153 = vmatpush2.bf16.msra.mxu0 0
    %154 = vmatprep.subr.bf16.mxu0 0
    %155 = vmatpush2.bf16.msra.mxu0 0
    %156 = vmatprep.subr.bf16.mxu0 0
    %157 = vmatpush2.bf16.msra.mxu0 0
    %158 = vmatprep.mubr.bf16.mxu0 0
    %159 = vmatmul.mubr.bf16.gmra.mxu0 %v124
    %v160 = vpop.f32.mrf.mxu0
    %v161 = vadd.f32 %v96, %v160
    %v162 = vpop.f32.mrf.mxu0
    %v163 = vpop.f32.mrf.mxu0
    %v164 = vpop.f32.mrf.mxu0
    %165 = vdwg.mxu0
    %vm166 = vcmp.gt.f32.partialorder %v161, 0.0
    %v167 = vmul.f32 %v161, 0.01
    %v168 = vsel %vm166, %v161, %v167
    %v169 = vpack.c.bf16 %v168, %v168
    %v170 = vld [vmem:[#allocation7] sm:$0xf]
    %v171 = vld [vmem:[#allocation7 + $0x4] sm:$0xf]
    %v172 = vld [vmem:[#allocation7 + $0x8] sm:$0xf]
    %v173 = vld [vmem:[#allocation7 + $0xc] sm:$0xf]
    %v174 = vld [vmem:[#allocation7 + $0x10] sm:$0xf]
    %v175 = vld [vmem:[#allocation7 + $0x14] sm:$0xf]
    %v176 = vld [vmem:[#allocation7 + $0x18] sm:$0xf]
    %v177 = vld [vmem:[#allocation7 + $0x1c] sm:$0xf]
    %v178 = vld [vmem:[#allocation7 + $0x20] sm:$0xf]
    %v179 = vld [vmem:[#allocation7 + $0x24] sm:$0xf]
    %v180 = vld [vmem:[#allocation7 + $0x28] sm:$0xf]
    %v181 = vld [vmem:[#allocation7 + $0x2c] sm:$0xf]
    %v182 = vld [vmem:[#allocation7 + $0x30] sm:$0xf]
    %v183 = vld [vmem:[#allocation7 + $0x34] sm:$0xf]
    %v184 = vld [vmem:[#allocation7 + $0x38] sm:$0xf]
    %v185 = vld [vmem:[#allocation7 + $0x3c] sm:$0xf]
    %v186 = vld [vmem:[%s4] sm:$0x1]
    %v188 = vlaneseq
    %v189 = vshrl.u32 %v188, 7
    %v190 = vsub.s32 0, %v189
    %v191 = vrot.slane %v186, %v190
    %v209 = vunpack.c.l.b16 %v170
    %v210 = vunpack.c.l.b16 %v171
    %v211 = vunpack.c.l.b16 %v172
    %v212 = vunpack.c.l.b16 %v173
    %v213 = vunpack.c.l.b16 %v174
    %v214 = vunpack.c.l.b16 %v175
    %v215 = vunpack.c.l.b16 %v176
    %v216 = vunpack.c.l.b16 %v177
    %v217 = vunpack.c.l.b16 %v178
    %v218 = vunpack.c.l.b16 %v179
    %v219 = vunpack.c.l.b16 %v180
    %v220 = vunpack.c.l.b16 %v181
    %v221 = vunpack.c.l.b16 %v182
    %v222 = vunpack.c.l.b16 %v183
    %v223 = vunpack.c.l.b16 %v184
    %v224 = vunpack.c.l.b16 %v185
    %v225 = vpack.c.b16 %v210, %v209
    %v226 = vpack.c.b16 %v212, %v211
    %v227 = vpack.c.b16 %v214, %v213
    %v228 = vpack.c.b16 %v216, %v215
    %v229 = vpack.c.b16 %v218, %v217
    %v230 = vpack.c.b16 %v220, %v219
    %v231 = vpack.c.b16 %v222, %v221
    %v232 = vpack.c.b16 %v224, %v223
    %241 = vmatprep.subr.bf16.mxu0 0
    %242 = vmatpush1.bf16.msra.mxu0 %v232
    %243 = vmatprep.subr.bf16.mxu0 0
    %244 = vmatpush1.bf16.msra.mxu0 %v231
    %245 = vmatprep.subr.bf16.mxu0 0
    %246 = vmatpush1.bf16.msra.mxu0 %v230
    %247 = vmatprep.subr.bf16.mxu0 0
    %248 = vmatpush1.bf16.msra.mxu0 %v229
    %249 = vmatprep.subr.bf16.mxu0 0
    %250 = vmatpush1.bf16.msra.mxu0 %v228
    %251 = vmatprep.subr.bf16.mxu0 0
    %252 = vmatpush1.bf16.msra.mxu0 %v227
    %253 = vmatprep.subr.bf16.mxu0 0
    %254 = vmatpush1.bf16.msra.mxu0 %v226
    %255 = vmatprep.subr.bf16.mxu0 0
    %256 = vmatpush1.bf16.msra.mxu0 %v225
    %257 = vmatprep.subr.bf16.mxu0 0
    %258 = vmatpush2.bf16.msra.mxu0 0
    %259 = vmatprep.subr.bf16.mxu0 0
    %260 = vmatpush2.bf16.msra.mxu0 0
    %261 = vmatprep.subr.bf16.mxu0 0
    %262 = vmatpush2.bf16.msra.mxu0 0
    %263 = vmatprep.subr.bf16.mxu0 0
    %264 = vmatpush2.bf16.msra.mxu0 0
    %265 = vmatprep.subr.bf16.mxu0 0
    %266 = vmatpush2.bf16.msra.mxu0 0
    %267 = vmatprep.subr.bf16.mxu0 0
    %268 = vmatpush2.bf16.msra.mxu0 0
    %269 = vmatprep.subr.bf16.mxu0 0
    %270 = vmatpush2.bf16.msra.mxu0 0
    %271 = vmatprep.subr.bf16.mxu0 0
    %272 = vmatpush2.bf16.msra.mxu0 0
    %273 = vmatprep.mubr.bf16.mxu0 0
    %274 = vmatmul.mubr.bf16.gmra.mxu0 %v169
    %v275 = vpop.f32.mrf.mxu0
    %v276 = vadd.f32 %v191, %v275
    %v277 = vpop.f32.mrf.mxu0
    %v278 = vpop.f32.mrf.mxu0
    %v279 = vpop.f32.mrf.mxu0
    %280 = vdwg.mxu0
    %vm281 = vcmp.gt.f32.partialorder %v276, 0.0
    %v282 = vmul.f32 %v276, 0.01
    %v283 = vsel %vm281, %v276, %v282
    %v284 = vpack.c.bf16 %v283, %v283
    %v285 = vld [vmem:[#allocation8] sm:$0xf]
    %v286 = vld [vmem:[#allocation8 + $0x4] sm:$0xf]
    %v287 = vld [vmem:[#allocation8 + $0x8] sm:$0xf]
    %v288 = vld [vmem:[#allocation8 + $0xc] sm:$0xf]
    %v289 = vld [vmem:[#allocation8 + $0x10] sm:$0xf]
    %v290 = vld [vmem:[#allocation8 + $0x14] sm:$0xf]
    %v291 = vld [vmem:[#allocation8 + $0x18] sm:$0xf]
    %v292 = vld [vmem:[#allocation8 + $0x1c] sm:$0xf]
    %v293 = vld [vmem:[#allocation8 + $0x20] sm:$0xf]
    %v294 = vld [vmem:[#allocation8 + $0x24] sm:$0xf]
    %v295 = vld [vmem:[#allocation8 + $0x28] sm:$0xf]
    %v296 = vld [vmem:[#allocation8 + $0x2c] sm:$0xf]
    %v297 = vld [vmem:[#allocation8 + $0x30] sm:$0xf]
    %v298 = vld [vmem:[#allocation8 + $0x34] sm:$0xf]
    %v299 = vld [vmem:[#allocation8 + $0x38] sm:$0xf]
    %v300 = vld [vmem:[#allocation8 + $0x3c] sm:$0xf]
    %v301 = vld [vmem:[%s6] sm:$0x1]
    %v303 = vlaneseq
    %v304 = vshrl.u32 %v303, 7
    %v305 = vsub.s32 0, %v304
    %v306 = vrot.slane %v301, %v305
    %v324 = vunpack.c.l.b16 %v285
    %v325 = vunpack.c.l.b16 %v286
    %v326 = vunpack.c.l.b16 %v287
    %v327 = vunpack.c.l.b16 %v288
    %v328 = vunpack.c.l.b16 %v289
    %v329 = vunpack.c.l.b16 %v290
    %v330 = vunpack.c.l.b16 %v291
    %v331 = vunpack.c.l.b16 %v292
    %v332 = vunpack.c.l.b16 %v293
    %v333 = vunpack.c.l.b16 %v294
    %v334 = vunpack.c.l.b16 %v295
    %v335 = vunpack.c.l.b16 %v296
    %v336 = vunpack.c.l.b16 %v297
    %v337 = vunpack.c.l.b16 %v298
    %v338 = vunpack.c.l.b16 %v299
    %v339 = vunpack.c.l.b16 %v300
    %v340 = vpack.c.b16 %v325, %v324
    %v341 = vpack.c.b16 %v327, %v326
    %v342 = vpack.c.b16 %v329, %v328
    %v343 = vpack.c.b16 %v331, %v330
    %v344 = vpack.c.b16 %v333, %v332
    %v345 = vpack.c.b16 %v335, %v334
    %v346 = vpack.c.b16 %v337, %v336
    %v347 = vpack.c.b16 %v339, %v338
    %356 = vmatprep.subr.bf16.mxu0 0
    %357 = vmatpush1.bf16.msra.mxu0 %v347
    %358 = vmatprep.subr.bf16.mxu0 0
    %359 = vmatpush1.bf16.msra.mxu0 %v346
    %360 = vmatprep.subr.bf16.mxu0 0
    %361 = vmatpush1.bf16.msra.mxu0 %v345
    %362 = vmatprep.subr.bf16.mxu0 0
    %363 = vmatpush1.bf16.msra.mxu0 %v344
    %364 = vmatprep.subr.bf16.mxu0 0
    %365 = vmatpush1.bf16.msra.mxu0 %v343
    %366 = vmatprep.subr.bf16.mxu0 0
    %367 = vmatpush1.bf16.msra.mxu0 %v342
    %368 = vmatprep.subr.bf16.mxu0 0
    %369 = vmatpush1.bf16.msra.mxu0 %v341
    %370 = vmatprep.subr.bf16.mxu0 0
    %371 = vmatpush1.bf16.msra.mxu0 %v340
    %372 = vmatprep.subr.bf16.mxu0 0
    %373 = vmatpush2.bf16.msra.mxu0 0
    %374 = vmatprep.subr.bf16.mxu0 0
    %375 = vmatpush2.bf16.msra.mxu0 0
    %376 = vmatprep.subr.bf16.mxu0 0
    %377 = vmatpush2.bf16.msra.mxu0 0
    %378 = vmatprep.subr.bf16.mxu0 0
    %379 = vmatpush2.bf16.msra.mxu0 0
    %380 = vmatprep.subr.bf16.mxu0 0
    %381 = vmatpush2.bf16.msra.mxu0 0
    %382 = vmatprep.subr.bf16.mxu0 0
    %383 = vmatpush2.bf16.msra.mxu0 0
    %384 = vmatprep.subr.bf16.mxu0 0
    %385 = vmatpush2.bf16.msra.mxu0 0
    %386 = vmatprep.subr.bf16.mxu0 0
    %387 = vmatpush2.bf16.msra.mxu0 0
    %388 = vmatprep.mubr.bf16.mxu0 0
    %389 = vmatmul.mubr.bf16.gmra.mxu0 %v284
    %v390 = vpop.f32.mrf.mxu0
    %v391 = vadd.f32 %v306, %v390
    %v392 = vpop.f32.mrf.mxu0
    %v393 = vpop.f32.mrf.mxu0
    %v394 = vpop.f32.mrf.mxu0
    %395 = vdwg.mxu0
    %396 = vst [vmem:[#allocation10] sm:$0xff] %v391
    // Predicated region
    $region46: #{tpu_custom_call.1} parent=1 // pred_check
      _
    $region47: #{tpu_custom_call.1} parent=1 // pred_check_branch
      %398 = sbr.rel (0) target = $region49
    $region48: #{tpu_custom_call.1} parent=1 // pred_region
      %s400 = ssub.s32 128, 128
      %401 = vsyncadd [#allocation4], %s400
      %s403 = sshll.u32 [#allocation10], 4
      %s404 = int_to_ptr.vmem [resolvable:$true] %s403
      %406 = dma.vmem_to_hbm [thread:$0]  %s404, 128, %s7, [#allocation4]
    $region49: #{tpu_custom_call.1} parent=1 // pred_fallthru
      _
    // Predicated region
    $region50: #{tpu_custom_call.1} parent=1 // pred_check
      _
    $region51: #{tpu_custom_call.1} parent=1 // pred_check_branch
      %408 = sbr.rel (0) target = $region53
    $region52: #{tpu_custom_call.1} parent=1 // pred_region
      %409 = dma.done [#allocation4], 128
    $region53: #{tpu_custom_call.1} parent=1 // pred_fallthru
      _
    %410 = vsyncpa [#allocation3], 1
    %411 = vsyncpa [#allocation6], 1
    %412 = vsyncpa [#allocation9], 1
    %413 = vsyncpa [#allocation4], 1

// kernel: tpu_custom_call.1
$region0: #{tpu_custom_call.1}
  #allocation0 [shape = 'u32[]', space=smem, size = 0x4, offset = 0x4, fixed_abs, tag = 'smem constant byte address 0x4 - core index']
  #allocation1 [shape = 'u32[144,128]{1,0:T(1,128)}', space=vmem, size = 0x12000, scoped, tag = 'internal scratch']
  %s0 = inlined_call_operand.hbm [shape: f32[8,64], index: 0, kind: input, shape index: {}]
  %s1 = inlined_call_operand.hbm [shape: bf16[64,128], index: 1, kind: input, shape index: {}]
  %s2 = inlined_call_operand.vmem [shape: f32[1,128], index: 2, kind: input, shape index: {}]
  %s3 = inlined_call_operand.hbm [shape: bf16[128,128], index: 3, kind: input, shape index: {}]
  %s4 = inlined_call_operand.vmem [shape: f32[1,128], index: 4, kind: input, shape index: {}]
  %s5 = inlined_call_operand.hbm [shape: bf16[128,128], index: 5, kind: input, shape index: {}]
  %s6 = inlined_call_operand.vmem [shape: f32[1,128], index: 6, kind: input, shape index: {}]
  %s7 = inlined_call_operand.hbm [shape: f32[8,128], index: 7, kind: output, shape index: {}]
  %s8 = sld [smem:[#allocation0]]
  $region54: #{tpu_custom_call.1} parent=0
    _
  %s10 = ssub.s32 1, %s8
  %s11 = scalar_select 0, %s10, %s8
  $region1: #{tpu_custom_call.1} parent=0
    #allocation2 [shape = 'u8[4096]{0}', space=vmem, size = 0x1000, scoped, tag = 'input window, operand 0, single buffered']
    #allocation3 [shape = 's32[1]{0}', space=sflag, size = 0x4, scoped, tag = 'scoped memory for tpu_custom_call.1']
    #allocation4 [shape = 's32[1]{0}', space=sflag, size = 0x4, scoped, tag = 'scoped memory for tpu_custom_call.1']
    #allocation5 [shape = 'u8[16384]{0}', space=vmem, size = 0x4000, scoped, tag = 'input window, operand 1, single buffered']
    #allocation6 [shape = 's32[1]{0}', space=sflag, size = 0x4, scoped, tag = 'scoped memory for tpu_custom_call.1']
    #allocation7 [shape = 'u8[32768]{0}', space=vmem, size = 0x8000, scoped, tag = 'input window, operand 3, single buffered']
    #allocation8 [shape = 'u8[32768]{0}', space=vmem, size = 0x8000, scoped, tag = 'input window, operand 5, single buffered']
    #allocation9 [shape = 's32[1]{0}', space=sflag, size = 0x4, scoped, tag = 'scoped memory for tpu_custom_call.1']
    #allocation10 [shape = 'u8[4096]{0}', space=vmem, size = 0x1000, scoped, tag = 'output window, operand 0, single buffered']
    %12 = vsyncpa [#allocation3], 0
    %13 = vsyncpa [#allocation6], 0
    %14 = vsyncpa [#allocation9], 0
    %15 = vsyncpa [#allocation4], 0
    // Predicated region
    $region2: #{tpu_custom_call.1} parent=1 // pred_check
      _
    $region3: #{tpu_custom_call.1} parent=1 // pred_check_branch
      %17 = sbr.rel (0) target = $region5
    $region4: #{tpu_custom_call.1} parent=1 // pred_region
      %s19 = ssub.s32 128, 128
      %20 = vsyncadd [#allocation3], %s19
      %s22 = sshll.u32 [#allocation2], 4
      %s23 = int_to_ptr.vmem [resolvable:$true] %s22
      %25 = dma.hbm_to_vmem [thread:$0]  %s0, 128, %s23, [#allocation3]
    $region5: #{tpu_custom_call.1} parent=1 // pred_fallthru
      _
    // Predicated region
    $region6: #{tpu_custom_call.1} parent=1 // pred_check
      _
    $region7: #{tpu_custom_call.1} parent=1 // pred_check_branch
      %27 = sbr.rel (0) target = $region9
    $region8: #{tpu_custom_call.1} parent=1 // pred_region
      %s29 = ssub.s32 512, 512
      %30 = vsyncadd [#allocation6], %s29
      %s31 = sshll.u32 [#allocation5], 4
      %s32 = int_to_ptr.vmem [resolvable:$true] %s31
      %37 = dma.hbm_to_vmem [thread:$0]  %s1, 512, %s32, [#allocation6], 64, 64, 4
    $region9: #{tpu_custom_call.1} parent=1 // pred_fallthru
      _
    // Predicated region
    $region10: #{tpu_custom_call.1} parent=1 // pred_check
      _
    $region11: #{tpu_custom_call.1} parent=1 // pred_check_branch
      %39 = sbr.rel (0) target = $region13
    $region12: #{tpu_custom_call.1} parent=1 // pred_region
      _
    $region13: #{tpu_custom_call.1} parent=1 // pred_fallthru
      _
    // Predicated region
    $region14: #{tpu_custom_call.1} parent=1 // pred_check
      _
    $region15: #{tpu_custom_call.1} parent=1 // pred_check_branch
      %41 = sbr.rel (0) target = $region17
    $region16: #{tpu_custom_call.1} parent=1 // pred_region
      %s43 = ssub.s32 1024, 1024
      %44 = vsyncadd [#allocation6], %s43
      %s45 = sshll.u32 [#allocation7], 4
      %s46 = int_to_ptr.vmem [resolvable:$true] %s45
      %51 = dma.hbm_to_vmem [thread:$0]  %s3, 1024, %s46, [#allocation6], 64, 64, 4
    $region17: #{tpu_custom_call.1} parent=1 // pred_fallthru
      _
    // Predicated region
    $region18: #{tpu_custom_call.1} parent=1 // pred_check
      _
    $region19: #{tpu_custom_call.1} parent=1 // pred_check_branch
      %53 = sbr.rel (0) target = $region21
    $region20: #{tpu_custom_call.1} parent=1 // pred_region
      _
    $region21: #{tpu_custom_call.1} parent=1 // pred_fallthru
      _
    // Predicated region
    $region22: #{tpu_custom_call.1} parent=1 // pred_check
      _
    $region23: #{tpu_custom_call.1} parent=1 // pred_check_branch
      %55 = sbr.rel (0) target = $region25
    $region24: #{tpu_custom_call.1} parent=1 // pred_region
      %s57 = ssub.s32 1024, 1024
      %58 = vsyncadd [#allocation9], %s57
      %s59 = sshll.u32 [#allocation8], 4
      %s60 = int_to_ptr.vmem [resolvable:$true] %s59
      %65 = dma.hbm_to_vmem [thread:$0]  %s5, 1024, %s60, [#allocation9], 64, 64, 4
    $region25: #{tpu_custom_call.1} parent=1 // pred_fallthru
      _
    // Predicated region
    $region26: #{tpu_custom_call.1} parent=1 // pred_check
      _
    $region27: #{tpu_custom_call.1} parent=1 // pred_check_branch
      %67 = sbr.rel (0) target = $region29
    $region28: #{tpu_custom_call.1} parent=1 // pred_region
      _
    $region29: #{tpu_custom_call.1} parent=1 // pred_fallthru
      _
    // Predicated region
    $region30: #{tpu_custom_call.1} parent=1 // pred_check
      _
    $region31: #{tpu_custom_call.1} parent=1 // pred_check_branch
      %69 = sbr.rel (0) target = $region33
    $region32: #{tpu_custom_call.1} parent=1 // pred_region
      %70 = dma.done [#allocation3], 128
    $region33: #{tpu_custom_call.1} parent=1 // pred_fallthru
      _
    // Predicated region
    $region34: #{tpu_custom_call.1} parent=1 // pred_check
      _
    $region35: #{tpu_custom_call.1} parent=1 // pred_check_branch
      %72 = sbr.rel (0) target = $region37
    $region36: #{tpu_custom_call.1} parent=1 // pred_region
      %73 = dma.done [#allocation6], 512
    $region37: #{tpu_custom_call.1} parent=1 // pred_fallthru
      _
    // Predicated region
    $region38: #{tpu_custom_call.1} parent=1 // pred_check
      _
    $region39: #{tpu_custom_call.1} parent=1 // pred_check_branch
      %75 = sbr.rel (0) target = $region41
    $region40: #{tpu_custom_call.1} parent=1 // pred_region
      %76 = dma.done [#allocation6], 1024
    $region41: #{tpu_custom_call.1} parent=1 // pred_fallthru
      _
    // Predicated region
    $region42: #{tpu_custom_call.1} parent=1 // pred_check
      _
    $region43: #{tpu_custom_call.1} parent=1 // pred_check_branch
      %78 = sbr.rel (0) target = $region45
    $region44: #{tpu_custom_call.1} parent=1 // pred_region
      %79 = dma.done [#allocation9], 1024
    $region45: #{tpu_custom_call.1} parent=1 // pred_fallthru
      _
    %v81 = vld [vmem:[#allocation2] sm:$0xff]
    %v82 = vpack.c.bf16 %v81, %v81
    %v83 = vld [vmem:[#allocation5] sm:$0xf]
    %v84 = vld [vmem:[#allocation5 + $0x4] sm:$0xf]
    %v85 = vld [vmem:[#allocation5 + $0x8] sm:$0xf]
    %v86 = vld [vmem:[#allocation5 + $0xc] sm:$0xf]
    %v87 = vld [vmem:[#allocation5 + $0x10] sm:$0xf]
    %v88 = vld [vmem:[#allocation5 + $0x14] sm:$0xf]
    %v89 = vld [vmem:[#allocation5 + $0x18] sm:$0xf]
    %v90 = vld [vmem:[#allocation5 + $0x1c] sm:$0xf]
    %v91 = vld [vmem:[%s2] sm:$0x1]
    %v93 = vlaneseq
    %v94 = vshrl.u32 %v93, 7
    %v95 = vsub.s32 0, %v94
    %v96 = vrot.slane %v91, %v95
    %v106 = vunpack.c.l.b16 %v83
    %v107 = vunpack.c.l.b16 %v84
    %v108 = vunpack.c.l.b16 %v85
    %v109 = vunpack.c.l.b16 %v86
    %v110 = vunpack.c.l.b16 %v87
    %v111 = vunpack.c.l.b16 %v88
    %v112 = vunpack.c.l.b16 %v89
    %v113 = vunpack.c.l.b16 %v90
    %v114 = vpack.c.b16 %v107, %v106
    %v115 = vpack.c.b16 %v109, %v108
    %v116 = vpack.c.b16 %v111, %v110
    %v117 = vpack.c.b16 %v113, %v112
    %vm122 = vcmask 523264
    %v124 = vsel %vm122, %v82, 0
    %126 = vmatprep.subr.bf16.mxu0 0
    %127 = vmatpush1.bf16.msra.mxu0 0
    %128 = vmatprep.subr.bf16.mxu0 0
    %129 = vmatpush1.bf16.msra.mxu0 0
    %130 = vmatprep.subr.bf16.mxu0 0
    %131 = vmatpush1.bf16.msra.mxu0 0
    %132 = vmatprep.subr.bf16.mxu0 0
    %133 = vmatpush1.bf16.msra.mxu0 0
    %134 = vmatprep.subr.bf16.mxu0 0
    %135 = vmatpush1.bf16.msra.mxu0 %v117
    %136 = vmatprep.subr.bf16.mxu0 0
    %137 = vmatpush1.bf16.msra.mxu0 %v116
    %138 = vmatprep.subr.bf16.mxu0 0
    %139 = vmatpush1.bf16.msra.mxu0 %v115
    %140 = vmatprep.subr.bf16.mxu0 0
    %141 = vmatpush1.bf16.msra.mxu0 %v114
    %142 = vmatprep.subr.bf16.mxu0 0
    %143 = vmatpush2.bf16.msra.mxu0 0
    %144 = vmatprep.subr.bf16.mxu0 0
    %145 = vmatpush2.bf16.msra.mxu0 0
    %146 = vmatprep.subr.bf16.mxu0 0
    %147 = vmatpush2.bf16.msra.mxu0 0
    %148 = vmatprep.subr.bf16.mxu0 0
    %149 = vmatpush2.bf16.msra.mxu0 0
    %150 = vmatprep.subr.bf16.mxu0 0
    %151 = vmatpush2.bf16.msra.mxu0 0
    %152 = vmatprep.subr.bf16.mxu0 0
    %153 = vmatpush2.bf16.msra.mxu0 0
    %154 = vmatprep.subr.bf16.mxu0 0
    %155 = vmatpush2.bf16.msra.mxu0 0
    %156 = vmatprep.subr.bf16.mxu0 0
    %157 = vmatpush2.bf16.msra.mxu0 0
    %158 = vmatprep.mubr.bf16.mxu0 0
    %159 = vmatmul.mubr.bf16.gmra.mxu0 %v124
    %v160 = vpop.f32.mrf.mxu0
    %v161 = vadd.f32 %v96, %v160
    %v162 = vpop.f32.mrf.mxu0
    %v163 = vpop.f32.mrf.mxu0
    %v164 = vpop.f32.mrf.mxu0
    %165 = vdwg.mxu0
    %vm166 = vcmp.gt.f32.partialorder %v161, 0.0
    %v167 = vmul.f32 %v161, 0.01
    %v168 = vsel %vm166, %v161, %v167
    %v169 = vpack.c.bf16 %v168, %v168
    %v170 = vld [vmem:[#allocation7] sm:$0xf]
    %v171 = vld [vmem:[#allocation7 + $0x4] sm:$0xf]
    %v172 = vld [vmem:[#allocation7 + $0x8] sm:$0xf]
    %v173 = vld [vmem:[#allocation7 + $0xc] sm:$0xf]
    %v174 = vld [vmem:[#allocation7 + $0x10] sm:$0xf]
    %v175 = vld [vmem:[#allocation7 + $0x14] sm:$0xf]
    %v176 = vld [vmem:[#allocation7 + $0x18] sm:$0xf]
    %v177 = vld [vmem:[#allocation7 + $0x1c] sm:$0xf]
    %v178 = vld [vmem:[#allocation7 + $0x20] sm:$0xf]
    %v179 = vld [vmem:[#allocation7 + $0x24] sm:$0xf]
    %v180 = vld [vmem:[#allocation7 + $0x28] sm:$0xf]
    %v181 = vld [vmem:[#allocation7 + $0x2c] sm:$0xf]
    %v182 = vld [vmem:[#allocation7 + $0x30] sm:$0xf]
    %v183 = vld [vmem:[#allocation7 + $0x34] sm:$0xf]
    %v184 = vld [vmem:[#allocation7 + $0x38] sm:$0xf]
    %v185 = vld [vmem:[#allocation7 + $0x3c] sm:$0xf]
    %v186 = vld [vmem:[%s4] sm:$0x1]
    %v188 = vlaneseq
    %v189 = vshrl.u32 %v188, 7
    %v190 = vsub.s32 0, %v189
    %v191 = vrot.slane %v186, %v190
    %v209 = vunpack.c.l.b16 %v170
    %v210 = vunpack.c.l.b16 %v171
    %v211 = vunpack.c.l.b16 %v172
    %v212 = vunpack.c.l.b16 %v173
    %v213 = vunpack.c.l.b16 %v174
    %v214 = vunpack.c.l.b16 %v175
    %v215 = vunpack.c.l.b16 %v176
    %v216 = vunpack.c.l.b16 %v177
    %v217 = vunpack.c.l.b16 %v178
    %v218 = vunpack.c.l.b16 %v179
    %v219 = vunpack.c.l.b16 %v180
    %v220 = vunpack.c.l.b16 %v181
    %v221 = vunpack.c.l.b16 %v182
    %v222 = vunpack.c.l.b16 %v183
    %v223 = vunpack.c.l.b16 %v184
    %v224 = vunpack.c.l.b16 %v185
    %v225 = vpack.c.b16 %v210, %v209
    %v226 = vpack.c.b16 %v212, %v211
    %v227 = vpack.c.b16 %v214, %v213
    %v228 = vpack.c.b16 %v216, %v215
    %v229 = vpack.c.b16 %v218, %v217
    %v230 = vpack.c.b16 %v220, %v219
    %v231 = vpack.c.b16 %v222, %v221
    %v232 = vpack.c.b16 %v224, %v223
    %241 = vmatprep.subr.bf16.mxu0 0
    %242 = vmatpush1.bf16.msra.mxu0 %v232
    %243 = vmatprep.subr.bf16.mxu0 0
    %244 = vmatpush1.bf16.msra.mxu0 %v231
    %245 = vmatprep.subr.bf16.mxu0 0
    %246 = vmatpush1.bf16.msra.mxu0 %v230
    %247 = vmatprep.subr.bf16.mxu0 0
    %248 = vmatpush1.bf16.msra.mxu0 %v229
    %249 = vmatprep.subr.bf16.mxu0 0
    %250 = vmatpush1.bf16.msra.mxu0 %v228
    %251 = vmatprep.subr.bf16.mxu0 0
    %252 = vmatpush1.bf16.msra.mxu0 %v227
    %253 = vmatprep.subr.bf16.mxu0 0
    %254 = vmatpush1.bf16.msra.mxu0 %v226
    %255 = vmatprep.subr.bf16.mxu0 0
    %256 = vmatpush1.bf16.msra.mxu0 %v225
    %257 = vmatprep.subr.bf16.mxu0 0
    %258 = vmatpush2.bf16.msra.mxu0 0
    %259 = vmatprep.subr.bf16.mxu0 0
    %260 = vmatpush2.bf16.msra.mxu0 0
    %261 = vmatprep.subr.bf16.mxu0 0
    %262 = vmatpush2.bf16.msra.mxu0 0
    %263 = vmatprep.subr.bf16.mxu0 0
    %264 = vmatpush2.bf16.msra.mxu0 0
    %265 = vmatprep.subr.bf16.mxu0 0
    %266 = vmatpush2.bf16.msra.mxu0 0
    %267 = vmatprep.subr.bf16.mxu0 0
    %268 = vmatpush2.bf16.msra.mxu0 0
    %269 = vmatprep.subr.bf16.mxu0 0
    %270 = vmatpush2.bf16.msra.mxu0 0
    %271 = vmatprep.subr.bf16.mxu0 0
    %272 = vmatpush2.bf16.msra.mxu0 0
    %273 = vmatprep.mubr.bf16.mxu0 0
    %274 = vmatmul.mubr.bf16.gmra.mxu0 %v169
    %v275 = vpop.f32.mrf.mxu0
    %v276 = vadd.f32 %v191, %v275
    %v277 = vpop.f32.mrf.mxu0
    %v278 = vpop.f32.mrf.mxu0
    %v279 = vpop.f32.mrf.mxu0
    %280 = vdwg.mxu0
    %vm281 = vcmp.gt.f32.partialorder %v276, 0.0
    %v282 = vmul.f32 %v276, 0.01
    %v283 = vsel %vm281, %v276, %v282
    %v284 = vpack.c.bf16 %v283, %v283
    %v285 = vld [vmem:[#allocation8] sm:$0xf]
    %v286 = vld [vmem:[#allocation8 + $0x4] sm:$0xf]
    %v287 = vld [vmem:[#allocation8 + $0x8] sm:$0xf]
    %v288 = vld [vmem:[#allocation8 + $0xc] sm:$0xf]
    %v289 = vld [vmem:[#allocation8 + $0x10] sm:$0xf]
    %v290 = vld [vmem:[#allocation8 + $0x14] sm:$0xf]
    %v291 = vld [vmem:[#allocation8 + $0x18] sm:$0xf]
    %v292 = vld [vmem:[#allocation8 + $0x1c] sm:$0xf]
    %v293 = vld [vmem:[#allocation8 + $0x20] sm:$0xf]
    %v294 = vld [vmem:[#allocation8 + $0x24] sm:$0xf]
    %v295 = vld [vmem:[#allocation8 + $0x28] sm:$0xf]
    %v296 = vld [vmem:[#allocation8 + $0x2c] sm:$0xf]
    %v297 = vld [vmem:[#allocation8 + $0x30] sm:$0xf]
    %v298 = vld [vmem:[#allocation8 + $0x34] sm:$0xf]
    %v299 = vld [vmem:[#allocation8 + $0x38] sm:$0xf]
    %v300 = vld [vmem:[#allocation8 + $0x3c] sm:$0xf]
    %v301 = vld [vmem:[%s6] sm:$0x1]
    %v303 = vlaneseq
    %v304 = vshrl.u32 %v303, 7
    %v305 = vsub.s32 0, %v304
    %v306 = vrot.slane %v301, %v305
    %v324 = vunpack.c.l.b16 %v285
    %v325 = vunpack.c.l.b16 %v286
    %v326 = vunpack.c.l.b16 %v287
    %v327 = vunpack.c.l.b16 %v288
    %v328 = vunpack.c.l.b16 %v289
    %v329 = vunpack.c.l.b16 %v290
    %v330 = vunpack.c.l.b16 %v291
    %v331 = vunpack.c.l.b16 %v292
    %v332 = vunpack.c.l.b16 %v293
    %v333 = vunpack.c.l.b16 %v294
    %v334 = vunpack.c.l.b16 %v295
    %v335 = vunpack.c.l.b16 %v296
    %v336 = vunpack.c.l.b16 %v297
    %v337 = vunpack.c.l.b16 %v298
    %v338 = vunpack.c.l.b16 %v299
    %v339 = vunpack.c.l.b16 %v300
    %v340 = vpack.c.b16 %v325, %v324
    %v341 = vpack.c.b16 %v327, %v326
    %v342 = vpack.c.b16 %v329, %v328
    %v343 = vpack.c.b16 %v331, %v330
    %v344 = vpack.c.b16 %v333, %v332
    %v345 = vpack.c.b16 %v335, %v334
    %v346 = vpack.c.b16 %v337, %v336
    %v347 = vpack.c.b16 %v339, %v338
    %356 = vmatprep.subr.bf16.mxu0 0
    %357 = vmatpush1.bf16.msra.mxu0 %v347
    %358 = vmatprep.subr.bf16.mxu0 0
    %359 = vmatpush1.bf16.msra.mxu0 %v346
    %360 = vmatprep.subr.bf16.mxu0 0
    %361 = vmatpush1.bf16.msra.mxu0 %v345
    %362 = vmatprep.subr.bf16.mxu0 0
    %363 = vmatpush1.bf16.msra.mxu0 %v344
    %364 = vmatprep.subr.bf16.mxu0 0
    %365 = vmatpush1.bf16.msra.mxu0 %v343
    %366 = vmatprep.subr.bf16.mxu0 0
    %367 = vmatpush1.bf16.msra.mxu0 %v342
    %368 = vmatprep.subr.bf16.mxu0 0
    %369 = vmatpush1.bf16.msra.mxu0 %v341
    %370 = vmatprep.subr.bf16.mxu0 0
    %371 = vmatpush1.bf16.msra.mxu0 %v340
    %372 = vmatprep.subr.bf16.mxu0 0
    %373 = vmatpush2.bf16.msra.mxu0 0
    %374 = vmatprep.subr.bf16.mxu0 0
    %375 = vmatpush2.bf16.msra.mxu0 0
    %376 = vmatprep.subr.bf16.mxu0 0
    %377 = vmatpush2.bf16.msra.mxu0 0
    %378 = vmatprep.subr.bf16.mxu0 0
    %379 = vmatpush2.bf16.msra.mxu0 0
    %380 = vmatprep.subr.bf16.mxu0 0
    %381 = vmatpush2.bf16.msra.mxu0 0
    %382 = vmatprep.subr.bf16.mxu0 0
    %383 = vmatpush2.bf16.msra.mxu0 0
    %384 = vmatprep.subr.bf16.mxu0 0
    %385 = vmatpush2.bf16.msra.mxu0 0
    %386 = vmatprep.subr.bf16.mxu0 0
    %387 = vmatpush2.bf16.msra.mxu0 0
    %388 = vmatprep.mubr.bf16.mxu0 0
    %389 = vmatmul.mubr.bf16.gmra.mxu0 %v284
    %v390 = vpop.f32.mrf.mxu0
    %v391 = vadd.f32 %v306, %v390
    %v392 = vpop.f32.mrf.mxu0
    %v393 = vpop.f32.mrf.mxu0
    %v394 = vpop.f32.mrf.mxu0
    %395 = vdwg.mxu0
    %396 = vst [vmem:[#allocation10] sm:$0xff] %v391
    // Predicated region
    $region46: #{tpu_custom_call.1} parent=1 // pred_check
      _
    $region47: #{tpu_custom_call.1} parent=1 // pred_check_branch
      %398 = sbr.rel (0) target = $region49
    $region48: #{tpu_custom_call.1} parent=1 // pred_region
      %s400 = ssub.s32 128, 128
      %401 = vsyncadd [#allocation4], %s400
      %s403 = sshll.u32 [#allocation10], 4
      %s404 = int_to_ptr.vmem [resolvable:$true] %s403
      %406 = dma.vmem_to_hbm [thread:$0]  %s404, 128, %s7, [#allocation4]
    $region49: #{tpu_custom_call.1} parent=1 // pred_fallthru
      _
    // Predicated region
    $region50: #{tpu_custom_call.1} parent=1 // pred_check
      _
    $region51: #{tpu_custom_call.1} parent=1 // pred_check_branch
      %408 = sbr.rel (0) target = $region53
    $region52: #{tpu_custom_call.1} parent=1 // pred_region
      %409 = dma.done [#allocation4], 128
    $region53: #{tpu_custom_call.1} parent=1 // pred_fallthru
      _
    %410 = vsyncpa [#allocation3], 1
    %411 = vsyncpa [#allocation6], 1
    %412 = vsyncpa [#allocation9], 1
    %413 = vsyncpa [#allocation4], 1

</llo_original>
